<compile_context>
chip_gen: v7x
topology: tpu7x:2x2x1
jax: 0.10.0
libtpu: 0.0.40
codegen_flags: <defaults>
</compile_context>

<pallas_src>
import jax
import jax.numpy as jnp
from jax.experimental import pallas as pl
from jax.experimental.pallas import tpu as pltpu


_VMEM_LIMIT_BYTES = 48 * 1024 * 1024   # safe on v7x (64 MiB physical per TC)
_LANE = 128


# ---------------------------------------------------------------------------
# Stage 1: dense projection  out = x @ W + b   (row-tiled, parallel grid)
# ---------------------------------------------------------------------------
def _proj_kernel(x_ref, w_ref, b_ref, o_ref):
    acc = jnp.dot(x_ref[...], w_ref[...], preferred_element_type=jnp.float32)
    o_ref[...] = (acc + b_ref[...]).astype(o_ref.dtype)


def _dense(x2d, w, b, out_dtype, row_tile=512):
    """x2d: (N, D), w: (D, F), b: (1, F) f32  ->  (N, F) out_dtype."""
    n, d = x2d.shape
    f = w.shape[1]
    rt = min(row_tile, n)
    n_pad = ((n + rt - 1) // rt) * rt
    if n_pad != n:
        x2d = jnp.pad(x2d, ((0, n_pad - n), (0, 0)))

    out = pl.pallas_call(
        _proj_kernel,
        out_shape=jax.ShapeDtypeStruct((n_pad, f), out_dtype),
        grid=(n_pad // rt,),
        in_specs=[
            pl.BlockSpec((rt, d), lambda i: (i, 0)),     # row tile of x
            pl.BlockSpec((d, f), lambda i: (0, 0)),      # weight resident
            pl.BlockSpec((1, f), lambda i: (0, 0)),      # bias resident
        ],
        out_specs=pl.BlockSpec((rt, f), lambda i: (i, 0)),
        compiler_params=pltpu.CompilerParams(
            dimension_semantics=("parallel",),
            vmem_limit_bytes=_VMEM_LIMIT_BYTES,
        ),
    )(x2d, w, b)
    return out[:n]


# ---------------------------------------------------------------------------
# Stage 2: fused recurrence + linear head.
# grid = (batch_blocks, T // block_t); time axis (last) is sequential.
# ---------------------------------------------------------------------------
def _lstm_fused_kernel(gx_ref, whh_ref, wlin_ref, blin_ref, y_ref, h_scr, c_scr):
    t_step = pl.program_id(1)

    # zero initial hidden / cell state at the start of each batch-block's sweep
    @pl.when(t_step == 0)
    def _():
        h_scr[...] = jnp.zeros_like(h_scr)
        c_scr[...] = jnp.zeros_like(c_scr)

    K = gx_ref.shape[0]          # timesteps fused in this grid step
    Bb = gx_ref.shape[1]         # batch rows in this block
    H = h_scr.shape[-1]
    O_pad = y_ref.shape[-1]

    # Hoist all weight / bias loads (and the bias broadcast) out of the
    # unrolled time loop — single VMEM->vreg load each, no per-iter broadcast.
    whh = whh_ref[...]           # (H, 4H)   bf16 on the production path
    wlin = wlin_ref[...]         # (H, O_pad)
    blin = jnp.broadcast_to(blin_ref[...], (Bb, O_pad))   # (Bb, O_pad) f32
    mm_dtype = whh.dtype

    def body(k, carry):
        h, c = carry
        # Only the recurrent matmul is on the serial path; input projection
        # and biases were precomputed into gx.  bf16 MXU inputs, f32 acc.
        gates = gx_ref[k].astype(jnp.float32) + jnp.dot(
            h.astype(mm_dtype), whh, preferred_element_type=jnp.float32
        )  # (Bb, 4H)
        # Whole-tile nonlinearities (2 EUP pushes) then slice; avoids 4
        # sub-vreg EUP ops + relayouts on the serial chain when H < 128.
        sg = jax.nn.sigmoid(gates)
        tg = jnp.tanh(gates)
        i_g = sg[:, 0 * H:1 * H]
        f_g = sg[:, 1 * H:2 * H]
        o_g = sg[:, 3 * H:4 * H]
        g_g = tg[:, 2 * H:3 * H]
        c_new = f_g * c + i_g * g_g
        h_new = o_g * jnp.tanh(c_new)
        # Fused linear head: depends only on h_new (off the recurrent dep
        # chain, scheduler can overlap it with the next step's matmul).
        # Output is lane-dense: O padded to 128 so stores are unmasked.
        y_t = jnp.dot(h_new.astype(mm_dtype), wlin,
                      preferred_element_type=jnp.float32) + blin
        y_ref[k] = y_t.astype(y_ref.dtype)
        return h_new, c_new

    # Carry h/c in vregs across the K fused timesteps; cap the unroll so a
    # realistic (B,4H) gates tile doesn't blow the 64-vreg file.
    unroll = True if K <= 8 else 8
    h_f, c_f = jax.lax.fori_loop(0, K, body, (h_scr[...], c_scr[...]),
                                 unroll=unroll)
    h_scr[...] = h_f
    c_scr[...] = c_f


def _choose_block_t(T, per_t_bytes, fixed_bytes, budget_bytes, target=64):
    """Largest divisor of T that is <= target and fits the VMEM budget."""
    best = 1
    for cand in range(1, T + 1):
        if T % cand:
            continue
        if cand > target:
            break
        if fixed_bytes + cand * per_t_bytes <= budget_bytes:
            best = cand
    return best


def lstm_forward(x, w_ih, w_hh, b_ih, b_hh, w_lin, b_lin, *,
                 block_t=None, batch_blocks=None, use_bf16=True):
    """x: (T, B, D) float32.  Returns y: (T, B, O) (matches nn.LSTM + nn.Linear)."""
    T, B, D = x.shape
    H = w_hh.shape[1]
    O = w_lin.shape[0]
    O_pad = ((O + _LANE - 1) // _LANE) * _LANE          # lane-dense output

    mm_dtype = jnp.bfloat16 if use_bf16 else jnp.float32

    # Pre-transpose weights for right-multiplication; fold both LSTM biases.
    wih_t = w_ih.T.astype(mm_dtype)                      # (D, 4H)
    whh_t = w_hh.T.astype(mm_dtype)                      # (H, 4H)
    b_gates = (b_ih + b_hh).reshape(1, 4 * H).astype(jnp.float32)
    wlin_t = jnp.zeros((H, O_pad), mm_dtype).at[:, :O].set(
        w_lin.T.astype(mm_dtype))                        # (H, O_pad)
    blin = jnp.zeros((1, O_pad), jnp.float32).at[:, :O].set(
        b_lin.astype(jnp.float32))                       # (1, O_pad)
    # TODO(synk): for very large H, additionally tile W_hh / pad H to a
    # multiple of 128 so gate slices stay lane-aligned on the serial path.

    # -- Stage 1: input projection for all timesteps at once ----------------
    # gx stored in bf16 (f32 accumulation inside the kernel) on the production
    # path -> halves HBM traffic of the largest intermediate.
    gx = _dense(x.reshape(T * B, D).astype(mm_dtype), wih_t, b_gates,
                out_dtype=mm_dtype).reshape(T, B, 4 * H)

    # -- Stage 2: fused recurrence + linear head -----------------------------
    # Optional batch split across TensorCores (v7x megacore) when B is large
    # and the per-core block stays bf16-tile aligned.
    if batch_blocks is None:
        batch_blocks = 2 if (B % 32 == 0) else 1
    assert B % batch_blocks == 0
    block_b = B // batch_blocks

    gx_item = jnp.dtype(gx.dtype).itemsize
    w_item = jnp.dtype(mm_dtype).itemsize
    per_t = (2 * block_b * 4 * H * gx_item          # double-buffered gx tile
             + 2 * block_b * O_pad * 4)             # double-buffered y tile
    fixed = ((H * 4 * H + H * O_pad) * w_item       # resident weights
             + O_pad * 4                            # bias
             + 2 * block_b * H * 4)                 # h/c scratch
    if block_t is None:
        block_t = _choose_block_t(T, per_t, fixed,
                                  int(0.55 * _VMEM_LIMIT_BYTES))
    assert T % block_t == 0

    y_pad = pl.pallas_call(
        _lstm_fused_kernel,
        out_shape=jax.ShapeDtypeStruct((T, B, O_pad), jnp.float32),
        grid=(batch_blocks, T // block_t),
        in_specs=[
            pl.BlockSpec((block_t, block_b, 4 * H), lambda bb, tt: (tt, bb, 0)),
            pl.BlockSpec((H, 4 * H), lambda bb, tt: (0, 0)),       # W_hh^T resident
            pl.BlockSpec((H, O_pad), lambda bb, tt: (0, 0)),       # W_lin^T resident
            pl.BlockSpec((1, O_pad), lambda bb, tt: (0, 0)),       # b_lin resident
        ],
        out_specs=pl.BlockSpec((block_t, block_b, O_pad),
                               lambda bb, tt: (tt, bb, 0)),
        scratch_shapes=[
            pltpu.VMEM((block_b, H), jnp.float32),   # hidden-state carry
            pltpu.VMEM((block_b, H), jnp.float32),   # cell-state carry
        ],
        compiler_params=pltpu.CompilerParams(
            dimension_semantics=("parallel", "arbitrary"),   # batch ∥, time serial
            vmem_limit_bytes=_VMEM_LIMIT_BYTES,
        ),
    )(gx, whh_t, wlin_t, blin)

    return y_pad[..., :O]


# ---------------------------------------------------------------------------
# Pure-JAX reference (mirrors torch nn.LSTM + nn.Linear, zero initial state)
# ---------------------------------------------------------------------------
def lstm_forward_ref(x, w_ih, w_hh, b_ih, b_hh, w_lin, b_lin):
    T, B, D = x.shape
    H = w_hh.shape[1]

    def step(carry, x_t):
        h, c = carry
        gates = x_t @ w_ih.T + h @ w_hh.T + b_ih + b_hh
        i_g = jax.nn.sigmoid(gates[:, 0 * H:1 * H])
        f_g = jax.nn.sigmoid(gates[:, 1 * H:2 * H])
        g_g = jnp.tanh(gates[:, 2 * H:3 * H])
        o_g = jax.nn.sigmoid(gates[:, 3 * H:4 * H])
        c_new = f_g * c + i_g * g_g
        h_new = o_g * jnp.tanh(c_new)
        return (h_new, c_new), h_new

    h0 = jnp.zeros((B, H), jnp.float32)
    c0 = jnp.zeros((B, H), jnp.float32)
    _, hs = jax.lax.scan(step, (h0, c0), x)
    return hs @ w_lin.T + b_lin


if __name__ == "__main__":
    # module hyper-params implied by the forward: x_input (seq, batch, input_dim)
    seq_len, batch, input_dim, hidden_dim, output_dim = 8, 2, 4, 32, 1

    key = jax.random.PRNGKey(0)
    ks = jax.random.split(key, 7)
    scale = 1.0 / jnp.sqrt(hidden_dim)

    x = jax.random.normal(ks[0], (seq_len, batch, input_dim), jnp.float32)
    # torch.nn.LSTM parameter shapes (gate order i, f, g, o):
    w_ih = jax.random.uniform(ks[1], (4 * hidden_dim, input_dim), jnp.float32,
                              -scale, scale)
    w_hh = jax.random.uniform(ks[2], (4 * hidden_dim, hidden_dim), jnp.float32,
                              -scale, scale)
    b_ih = jax.random.uniform(ks[3], (4 * hidden_dim,), jnp.float32, -scale, scale)
    b_hh = jax.random.uniform(ks[4], (4 * hidden_dim,), jnp.float32, -scale, scale)
    # torch.nn.Linear parameter shapes:
    w_lin = jax.random.uniform(ks[5], (output_dim, hidden_dim), jnp.float32,
                               -scale, scale)
    b_lin = jax.random.uniform(ks[6], (output_dim,), jnp.float32, -scale, scale)

    y_ref = lstm_forward_ref(x, w_ih, w_hh, b_ih, b_hh, w_lin, b_lin)

    # f32 verification path: must match the f32 reference tightly.
    y32 = lstm_forward(x, w_ih, w_hh, b_ih, b_hh, w_lin, b_lin, use_bf16=False)
    y32 = jax.block_until_ready(y32)
    assert y32.shape == (seq_len, batch, output_dim)
    assert jnp.allclose(y32, y_ref, atol=1e-5, rtol=1e-5)

    # bf16-MXU production path: looser tolerance (bf16 matmul inputs, f32 acc).
    y16 = lstm_forward(x, w_ih, w_hh, b_ih, b_hh, w_lin, b_lin, use_bf16=True)
    y16 = jax.block_until_ready(y16)
    assert y16.shape == (seq_len, batch, output_dim)
    assert jnp.allclose(y16, y_ref, atol=5e-2, rtol=5e-2)

    print("KERNEL_OK")
</pallas_src>

<mosaic_0001>
module attributes {stable_mosaic.version = 11 : i64} {
  func.func @_proj_kernel(%arg0: i32, %arg1: memref<16x4xf32, #tpu.memory_space<vmem>>, %arg2: memref<4x128xf32, #tpu.memory_space<vmem>>, %arg3: memref<1x128xf32, #tpu.memory_space<vmem>>, %arg4: memref<16x128xf32, #tpu.memory_space<vmem>>) attributes {dimension_semantics = [#tpu.dimension_semantics<parallel>], iteration_bounds = array<i64: 1>, scalar_prefetch = 0 : i64, scratch_operands = 0 : i64, tpu.core_type = #tpu.core_type<tc>, window_params = [{transform_indices = @transform_0, window_bounds = array<i64: 16, 4>}, {pipeline_mode = #tpu.pipeline_mode<synchronous>, transform_indices = @transform_1, window_bounds = array<i64: 4, 128>}, {pipeline_mode = #tpu.pipeline_mode<synchronous>, transform_indices = @transform_2, window_bounds = array<i64: 1, 128>}, {transform_indices = @transform_3, window_bounds = array<i64: 16, 128>}]} {
    %c0 = arith.constant 0 : index
    %c0_0 = arith.constant 0 : index
    %0 = vector.load %arg1[%c0, %c0_0] : memref<16x4xf32, #tpu.memory_space<vmem>>, vector<16x4xf32>
    %c0_1 = arith.constant 0 : index
    %c0_2 = arith.constant 0 : index
    %1 = vector.load %arg2[%c0_1, %c0_2] : memref<4x128xf32, #tpu.memory_space<vmem>>, vector<4x128xf32>
    %cst = arith.constant dense<0.000000e+00> : vector<16x128xf32>
    %2 = tpu.matmul %0, %1, %cst {dimension_numbers = #tpu.dot_dimension_numbers<[1], [0], [0], [1], [0, 0, 1, 1], [], []>} : vector<16x4xf32>, vector<4x128xf32>, vector<16x128xf32> -> vector<16x128xf32>
    %c0_3 = arith.constant 0 : index
    %c0_4 = arith.constant 0 : index
    %3 = vector.load %arg3[%c0_3, %c0_4] : memref<1x128xf32, #tpu.memory_space<vmem>>, vector<1x128xf32>
    %4 = vector.broadcast %3 : vector<1x128xf32> to vector<16x128xf32>
    %5 = arith.addf %2, %4 : vector<16x128xf32>
    %c0_5 = arith.constant 0 : index
    %c0_6 = arith.constant 0 : index
    %6 = vector.load %arg4[%c0_5, %c0_6] : memref<16x128xf32, #tpu.memory_space<vmem>>, vector<16x128xf32>
    tpu.vector_store %arg4[%c0_5, %c0_6], %5 {strides = array<i32>} : memref<16x128xf32, #tpu.memory_space<vmem>>, vector<16x128xf32>,
    return
  }
  func.func @transform_0(%arg0: i32) -> (i32, i32) {
    %c0_i32 = arith.constant 0 : i32
    %c0_i32_0 = arith.constant 0 : i32
    return %arg0, %c0_i32 : i32, i32
  }
  func.func @transform_1(%arg0: i32) -> (i32, i32) {
    %c0_i32 = arith.constant 0 : i32
    %c0_i32_0 = arith.constant 0 : i32
    %c0_i32_1 = arith.constant 0 : i32
    return %c0_i32, %c0_i32_0 : i32, i32
  }
  func.func @transform_2(%arg0: i32) -> (i32, i32) {
    %c0_i32 = arith.constant 0 : i32
    %c0_i32_0 = arith.constant 0 : i32
    %c0_i32_1 = arith.constant 0 : i32
    return %c0_i32, %c0_i32_0 : i32, i32
  }
  func.func @transform_3(%arg0: i32) -> (i32, i32) {
    %c0_i32 = arith.constant 0 : i32
    %c0_i32_0 = arith.constant 0 : i32
    return %arg0, %c0_i32 : i32, i32
  }
}

</mosaic_0001>

<llo_original>
// kernel: tpu_custom_call.1
$region0: #{tpu_custom_call.1}
  #allocation0 [shape = 'u32[]', space=smem, size = 0x4, offset = 0x4, fixed_abs, tag = 'smem constant byte address 0x4 - core index']
  #allocation1 [shape = 'u32[144,128]{1,0:T(1,128)}', space=vmem, size = 0x12000, scoped, tag = 'internal scratch']
  %s0 = inlined_call_operand.vmem [shape: f32[16,4], index: 0, kind: input, shape index: {}]
  %s1 = inlined_call_operand.vmem [shape: f32[4,128], index: 1, kind: input, shape index: {}]
  %s2 = inlined_call_operand.vmem [shape: f32[1,128], index: 2, kind: input, shape index: {}]
  %s3 = inlined_call_operand.hbm [shape: f32[16,128], index: 3, kind: output, shape index: {}]
  %s4 = sld [smem:[#allocation0]]
  $region22: #{tpu_custom_call.1} parent=0
    _
  %s6 = ssub.s32 1, %s4
  %s7 = scalar_select 0, %s6, %s4
  $region1: #{tpu_custom_call.1} parent=0
    #allocation2 [shape = 'u8[8192]{0}', space=vmem, size = 0x2000, scoped, tag = 'output window, operand 0, single buffered']
    #allocation3 [shape = 's32[1]{0}', space=sflag, size = 0x4, scoped, tag = 'scoped memory for tpu_custom_call.1']
    %8 = vsyncpa [#allocation3], 0
    // Predicated region
    $region2: #{tpu_custom_call.1} parent=1 // pred_check
      _
    $region3: #{tpu_custom_call.1} parent=1 // pred_check_branch
      %10 = sbr.rel (0) target = $region5
    $region4: #{tpu_custom_call.1} parent=1 // pred_region
      _
    $region5: #{tpu_custom_call.1} parent=1 // pred_fallthru
      _
    // Predicated region
    $region6: #{tpu_custom_call.1} parent=1 // pred_check
      _
    $region7: #{tpu_custom_call.1} parent=1 // pred_check_branch
      %12 = sbr.rel (0) target = $region9
    $region8: #{tpu_custom_call.1} parent=1 // pred_region
      _
    $region9: #{tpu_custom_call.1} parent=1 // pred_fallthru
      _
    // Predicated region
    $region10: #{tpu_custom_call.1} parent=1 // pred_check
      _
    $region11: #{tpu_custom_call.1} parent=1 // pred_check_branch
      %14 = sbr.rel (0) target = $region13
    $region12: #{tpu_custom_call.1} parent=1 // pred_region
      _
    $region13: #{tpu_custom_call.1} parent=1 // pred_fallthru
      _
    %v15 = vld [vmem:[%s0] sm:$0xff]
    %v16 = vld [vmem:[%s0 + $0x8] sm:$0xff]
    %v17 = vld [vmem:[%s1] sm:$0xf]
    %v18 = vld [vmem:[%s2] sm:$0x1]
    %v20 = vlaneseq
    %v21 = vshrl.u32 %v20, 7
    %v22 = vsub.s32 0, %v21
    %v23 = vrot.slane %v18, %v22
    %vm25 = vcmask 31744
    %v27 = vsel %vm25, %v15, 0
    %v30 = vsel %vm25, %v16, 0
    %vm32 = vcmask 1043456
    %v34 = vsel %vm32, %v17, 0
    %36 = vmatprep.subr.mxu0 0.0
    %37 = vmatpush1.msra.mxu0 %v34
    %38 = vmatprep.subr.mxu0 0.0
    %39 = vmatpush1.msra.mxu0 0.0
    %40 = vmatprep.subr.mxu0 0.0
    %41 = vmatpush1.msra.mxu0 0.0
    %42 = vmatprep.subr.mxu0 0.0
    %43 = vmatpush1.msra.mxu0 0.0
    %44 = vmatprep.subr.mxu0 0.0
    %45 = vmatpush1.msra.mxu0 0.0
    %46 = vmatprep.subr.mxu0 0.0
    %47 = vmatpush1.msra.mxu0 0.0
    %48 = vmatprep.subr.mxu0 0.0
    %49 = vmatpush1.msra.mxu0 0.0
    %50 = vmatprep.subr.mxu0 0.0
    %51 = vmatpush1.msra.mxu0 0.0
    %52 = vmatprep.subr.mxu0 0.0
    %53 = vmatpush1.msra.mxu0 0.0
    %54 = vmatprep.subr.mxu0 0.0
    %55 = vmatpush1.msra.mxu0 0.0
    %56 = vmatprep.subr.mxu0 0.0
    %57 = vmatpush1.msra.mxu0 0.0
    %58 = vmatprep.subr.mxu0 0.0
    %59 = vmatpush1.msra.mxu0 0.0
    %60 = vmatprep.subr.mxu0 0.0
    %61 = vmatpush1.msra.mxu0 0.0
    %62 = vmatprep.subr.mxu0 0.0
    %63 = vmatpush1.msra.mxu0 0.0
    %64 = vmatprep.subr.mxu0 0.0
    %65 = vmatpush1.msra.mxu0 0.0
    %66 = vmatprep.subr.mxu0 0.0
    %67 = vmatpush1.msra.mxu0 0.0
    %68 = vmatprep.subr.mxu0 0.0
    %69 = vmatpush1.msra.mxu0 0.0
    %70 = vmatprep.subr.mxu0 0.0
    %71 = vmatpush1.msra.mxu0 0.0
    %72 = vmatprep.subr.mxu0 0.0
    %73 = vmatpush1.msra.mxu0 0.0
    %74 = vmatprep.subr.mxu0 0.0
    %75 = vmatpush1.msra.mxu0 0.0
    %76 = vmatprep.subr.mxu0 0.0
    %77 = vmatpush1.msra.mxu0 0.0
    %78 = vmatprep.subr.mxu0 0.0
    %79 = vmatpush1.msra.mxu0 0.0
    %80 = vmatprep.subr.mxu0 0.0
    %81 = vmatpush1.msra.mxu0 0.0
    %82 = vmatprep.subr.mxu0 0.0
    %83 = vmatpush1.msra.mxu0 0.0
    %84 = vmatprep.subr.mxu0 0.0
    %85 = vmatpush1.msra.mxu0 0.0
    %86 = vmatprep.subr.mxu0 0.0
    %87 = vmatpush1.msra.mxu0 0.0
    %88 = vmatprep.subr.mxu0 0.0
    %89 = vmatpush1.msra.mxu0 0.0
    %90 = vmatprep.subr.mxu0 0.0
    %91 = vmatpush1.msra.mxu0 0.0
    %92 = vmatprep.subr.mxu0 0.0
    %93 = vmatpush1.msra.mxu0 0.0
    %94 = vmatprep.subr.mxu0 0.0
    %95 = vmatpush1.msra.mxu0 0.0
    %96 = vmatprep.subr.mxu0 0.0
    %97 = vmatpush1.msra.mxu0 0.0
    %98 = vmatprep.subr.mxu0 0.0
    %99 = vmatpush1.msra.mxu0 0.0
    %100 = vmatprep.mubr.f32.mxu0 0.0
    %101 = vmatmul.mubr.f32.gmra.mrb[0].mxu0 %v27
    %v102 = vpop.f32.mrb[0].mxu0
    %v103 = vadd.f32 %v23, %v102
    %v104 = vpop.f32.mrb[0].mxu0
    %105 = vmatprep.mubr.f32.mxu0 0.0
    %106 = vmatmul.mubr.f32.gmra.mrb[0].mxu0 %v30
    %v107 = vpop.f32.mrb[0].mxu0
    %v108 = vadd.f32 %v23, %v107
    %v109 = vpop.f32.mrb[0].mxu0
    %110 = vdwg.mxu0
    %111 = vst [vmem:[#allocation2] sm:$0xff] %v103
    %112 = vst [vmem:[#allocation2 + $0x8] sm:$0xff] %v108
    // Predicated region
    $region14: #{tpu_custom_call.1} parent=1 // pred_check
      _
    $region15: #{tpu_custom_call.1} parent=1 // pred_check_branch
      %114 = sbr.rel (0) target = $region17
    $region16: #{tpu_custom_call.1} parent=1 // pred_region
      %s116 = ssub.s32 256, 256
      %117 = vsyncadd [#allocation3], %s116
      %s118 = sshll.u32 [#allocation2], 4
      %s119 = int_to_ptr.vmem [resolvable:$true] %s118
      %124 = dma.vmem_to_hbm [thread:$0]  %s119, 256, %s3, [#allocation3], 128, 128, 8
    $region17: #{tpu_custom_call.1} parent=1 // pred_fallthru
      _
    // Predicated region
    $region18: #{tpu_custom_call.1} parent=1 // pred_check
      _
    $region19: #{tpu_custom_call.1} parent=1 // pred_check_branch
      %126 = sbr.rel (0) target = $region21
    $region20: #{tpu_custom_call.1} parent=1 // pred_region
      %127 = dma.done [#allocation3], 256
    $region21: #{tpu_custom_call.1} parent=1 // pred_fallthru
      _
    %128 = vsyncpa [#allocation3], 1

</llo_original>
